<compile_context>
chip_gen: v7x
topology: tpu7x:2x2x1
jax: 0.10.0
libtpu: 0.0.40
codegen_flags: <defaults>
</compile_context>

<pallas_src>
import jax
import jax.numpy as jnp
from jax.experimental import pallas as pl
from jax.experimental.pallas import tpu as pltpu


def _row_score_kernel(x_ref, w_ref, b_ref, o_ref):
    # x_ref: (TM, H) rows of the current tile, native dtype (pipelined).
    # w_ref: (1, H)  f32 weight row, resident across the grid.
    # b_ref: (1,)    f32 bias in SMEM.
    # o_ref: (TM, 1) per-row scores (output dtype = input dtype).
    x = x_ref[...].astype(jnp.float32)                       # (TM, H) f32 accum
    w = w_ref[...]                                           # (1, H)  f32
    score = jnp.sum(x * w, axis=1, keepdims=True) + b_ref[0]  # (TM, 1) f32
    o_ref[...] = score.astype(o_ref.dtype)


def _linear_to_score(x2d, w, b, *, tm_default=2048, vmem_budget=20 * 1024 * 1024):
    """x2d: (M, H) rows, w: (1, H) f32, b: (1,) f32 -> (M, 1) scores (x2d.dtype)."""
    M, H = x2d.shape
    itemsize = jnp.dtype(x2d.dtype).itemsize

    # VMEM working set per active tile:
    #   2 x TM*H*itemsize   (double-buffered input block)
    # + TM*H*4              (f32 cast of the tile)
    # + TM*H*4              (f32 product temp before the lane reduce)
    # + small (weight row, (TM,1) output blocks)
    bytes_per_row = H * (2 * itemsize + 8) + 16
    tm_cap = max(8, (vmem_budget // bytes_per_row) // 8 * 8)
    tm = min(tm_default, tm_cap)

    if M <= tm:
        tm = M                       # single full-extent block (always legal)
        num_tiles = 1
    else:
        num_tiles = pl.cdiv(M, tm)   # ragged last block handled by Pallas masking

    return pl.pallas_call(
        _row_score_kernel,
        out_shape=jax.ShapeDtypeStruct((M, 1), x2d.dtype),
        grid=(num_tiles,),
        in_specs=[
            pl.BlockSpec((tm, H), lambda i: (i, 0)),            # row tile (pipelined)
            pl.BlockSpec((1, H), lambda i: (0, 0)),             # weight row (resident)
            pl.BlockSpec(memory_space=pltpu.MemorySpace.SMEM),  # bias scalar
        ],
        out_specs=pl.BlockSpec((tm, 1), lambda i: (i, 0)),
        compiler_params=pltpu.CompilerParams(
            dimension_semantics=("parallel",),       # v7x: shard tiles over 2 TCs
            vmem_limit_bytes=32 * 1024 * 1024,       # explicit: safe on v5e/v6e/v7x
        ),
    )(x2d, w, b)


class AlignmentPredictionHeadPallas:
    """JAX/Pallas port of AlignmentPredictionHead (two Linear(H -> 1) heads)."""

    def __init__(self, hidden_size, key):
        k1, k2, k3, k4 = jax.random.split(key, 4)
        bound = float(hidden_size) ** -0.5
        # nn.Linear(hidden_size, 1): weight (1, H), bias (1,) — already kernel-ready.
        self.seq_w = jax.random.uniform(k1, (1, hidden_size), jnp.float32, -bound, bound)
        self.seq_b = jax.random.uniform(k2, (1,), jnp.float32, -bound, bound)
        self.alig_w = jax.random.uniform(k3, (1, hidden_size), jnp.float32, -bound, bound)
        self.alig_b = jax.random.uniform(k4, (1,), jnp.float32, -bound, bound)
        self.hidden_size = hidden_size

    def __call__(self, sentence_output, doc_output):
        H = self.hidden_size
        sent2d = sentence_output.reshape(-1, H)   # native dtype; streamed once
        doc2d = doc_output.reshape(-1, H)

        # Sentence head: streamed over row tiles.
        sent_score = _linear_to_score(sent2d, self.seq_w, self.seq_b)
        # Doc head: tiny, runs exactly once (hoisted out of the sentence stream).
        alig_score = _linear_to_score(doc2d, self.alig_w, self.alig_b)

        return (sent_score.reshape(*sentence_output.shape[:-1], 1),
                alig_score.reshape(*doc_output.shape[:-1], 1))


if __name__ == "__main__":
    key = jax.random.PRNGKey(0)
    k_params, k_sent, k_doc = jax.random.split(key, 3)

    batch, seq, hidden = 2, 8, 32
    head = AlignmentPredictionHeadPallas(hidden, k_params)

    sentence_output = jax.random.normal(k_sent, (batch, seq, hidden), jnp.float32)
    doc_output = jax.random.normal(k_doc, (batch, hidden), jnp.float32)

    sent_score, alig_score = head(sentence_output, doc_output)
    jax.block_until_ready((sent_score, alig_score))

    # reference check (plain JAX)
    ref_sent = sentence_output @ head.seq_w.T + head.seq_b
    ref_alig = doc_output @ head.alig_w.T + head.alig_b
    assert sent_score.shape == (batch, seq, 1)
    assert alig_score.shape == (batch, 1)
    assert jnp.allclose(sent_score, ref_sent, atol=1e-5)
    assert jnp.allclose(alig_score, ref_alig, atol=1e-5)

    print("KERNEL_OK")
</pallas_src>

<mosaic_0001>
module attributes {stable_mosaic.version = 11 : i64} {
  func.func @_row_score_kernel(%arg0: i32, %arg1: memref<16x32xf32, #tpu.memory_space<vmem>>, %arg2: memref<1x32xf32, #tpu.memory_space<vmem>>, %arg3: memref<1xf32, #tpu.memory_space<smem>>, %arg4: memref<16x1xf32, #tpu.memory_space<vmem>>) attributes {dimension_semantics = [#tpu.dimension_semantics<parallel>], iteration_bounds = array<i64: 1>, scalar_prefetch = 0 : i64, scratch_operands = 0 : i64, tpu.core_type = #tpu.core_type<tc>, window_params = [{transform_indices = @transform_0, window_bounds = array<i64: 16, 32>}, {pipeline_mode = #tpu.pipeline_mode<synchronous>, transform_indices = @transform_1, window_bounds = array<i64: 1, 32>}, {transform_indices = @transform_2, window_bounds = array<i64: 1>}, {transform_indices = @transform_3, window_bounds = array<i64: 16, 1>}]} {
    %c0 = arith.constant 0 : index
    %c0_0 = arith.constant 0 : index
    %0 = vector.load %arg1[%c0, %c0_0] : memref<16x32xf32, #tpu.memory_space<vmem>>, vector<16x32xf32>
    %c0_1 = arith.constant 0 : index
    %c0_2 = arith.constant 0 : index
    %1 = vector.load %arg2[%c0_1, %c0_2] : memref<1x32xf32, #tpu.memory_space<vmem>>, vector<1x32xf32>
    %2 = vector.broadcast %1 : vector<1x32xf32> to vector<16x32xf32>
    %3 = arith.mulf %0, %2 : vector<16x32xf32>
    %cst = arith.constant dense<0.000000e+00> : vector<16xf32>
    %4 = vector.multi_reduction <add>, %3, %cst [1] : vector<16x32xf32> to vector<16xf32>
    %5 = vector.shape_cast %4 : vector<16xf32> to vector<16x1xf32>
    %c0_3 = arith.constant 0 : index
    %6 = memref.load %arg3[%c0_3] : memref<1xf32, #tpu.memory_space<smem>>
    %7 = vector.broadcast %6 : f32 to vector<16x1xf32>
    %8 = arith.addf %5, %7 : vector<16x1xf32>
    %c0_4 = arith.constant 0 : index
    %c0_5 = arith.constant 0 : index
    %9 = vector.load %arg4[%c0_4, %c0_5] : memref<16x1xf32, #tpu.memory_space<vmem>>, vector<16x1xf32>
    tpu.vector_store %arg4[%c0_4, %c0_5], %8 {strides = array<i32>} : memref<16x1xf32, #tpu.memory_space<vmem>>, vector<16x1xf32>,
    return
  }
  func.func @transform_0(%arg0: i32) -> (i32, i32) {
    %c0_i32 = arith.constant 0 : i32
    %c0_i32_0 = arith.constant 0 : i32
    return %arg0, %c0_i32 : i32, i32
  }
  func.func @transform_1(%arg0: i32) -> (i32, i32) {
    %c0_i32 = arith.constant 0 : i32
    %c0_i32_0 = arith.constant 0 : i32
    %c0_i32_1 = arith.constant 0 : i32
    return %c0_i32, %c0_i32_0 : i32, i32
  }
  func.func @transform_2(%arg0: i32) -> i32 {
    %c0_i32 = arith.constant 0 : i32
    %c0_i32_0 = arith.constant 0 : i32
    return %c0_i32 : i32
  }
  func.func @transform_3(%arg0: i32) -> (i32, i32) {
    %c0_i32 = arith.constant 0 : i32
    %c0_i32_0 = arith.constant 0 : i32
    return %arg0, %c0_i32 : i32, i32
  }
}

</mosaic_0001>

<llo_original>
// kernel: tpu_custom_call.1
$region0: #{tpu_custom_call.1}
  #allocation0 [shape = 'u32[]', space=smem, size = 0x4, offset = 0x4, fixed_abs, tag = 'smem constant byte address 0x4 - core index']
  #allocation1 [shape = 'u32[144,128]{1,0:T(1,128)}', space=vmem, size = 0x12000, scoped, tag = 'internal scratch']
  #allocation2 [shape = 'f32[1]{0:T(128)S(6)}', space=smem, size = 0x200, scoped, tag = 'scoped memory for tpu_custom_call.1']
  %s0 = inlined_call_operand.hbm [shape: f32[16,32], index: 0, kind: input, shape index: {}]
  %s1 = inlined_call_operand.vmem [shape: f32[1,32], index: 1, kind: input, shape index: {}]
  %s2 = inlined_call_operand.<no memory space> [shape: f32[1], index: 2, kind: input, shape index: {}]
  %s3 = inlined_call_operand.vmem [shape: f32[16,1], index: 3, kind: output, shape index: {}]
  %s4 = sld [smem:[#allocation0]]
  $region26: #{tpu_custom_call.1} parent=0
    _
  %s6 = ssub.s32 1, %s4
  %s7 = scalar_select 0, %s6, %s4
  %8 = sst [smem:[#allocation2]] %s2
  $region1: #{tpu_custom_call.1} parent=0
    #allocation3 [shape = 'u8[8192]{0}', space=vmem, size = 0x2000, scoped, tag = 'input window, operand 0, single buffered']
    #allocation4 [shape = 's32[1]{0}', space=sflag, size = 0x4, scoped, tag = 'scoped memory for tpu_custom_call.1']
    %9 = vsyncpa [#allocation4], 0
    // Predicated region
    $region2: #{tpu_custom_call.1} parent=1 // pred_check
      _
    $region3: #{tpu_custom_call.1} parent=1 // pred_check_branch
      %11 = sbr.rel (0) target = $region5
    $region4: #{tpu_custom_call.1} parent=1 // pred_region
      %s13 = ssub.s32 256, 256
      %14 = vsyncadd [#allocation4], %s13
      %s15 = sshll.u32 [#allocation3], 4
      %s16 = int_to_ptr.vmem [resolvable:$true] %s15
      %21 = dma.hbm_to_vmem [thread:$0]  %s0, 256, %s16, [#allocation4], 128, 128, 8
    $region5: #{tpu_custom_call.1} parent=1 // pred_fallthru
      _
    // Predicated region
    $region6: #{tpu_custom_call.1} parent=1 // pred_check
      _
    $region7: #{tpu_custom_call.1} parent=1 // pred_check_branch
      %23 = sbr.rel (0) target = $region9
    $region8: #{tpu_custom_call.1} parent=1 // pred_region
      _
    $region9: #{tpu_custom_call.1} parent=1 // pred_fallthru
      _
    // Predicated region
    $region10: #{tpu_custom_call.1} parent=1 // pred_check
      _
    $region11: #{tpu_custom_call.1} parent=1 // pred_check_branch
      %25 = sbr.rel (0) target = $region13
    $region12: #{tpu_custom_call.1} parent=1 // pred_region
      _
    $region13: #{tpu_custom_call.1} parent=1 // pred_fallthru
      _
    // Predicated region
    $region14: #{tpu_custom_call.1} parent=1 // pred_check
      _
    $region15: #{tpu_custom_call.1} parent=1 // pred_check_branch
      %27 = sbr.rel (0) target = $region17
    $region16: #{tpu_custom_call.1} parent=1 // pred_region
      %28 = dma.done [#allocation4], 256
    $region17: #{tpu_custom_call.1} parent=1 // pred_fallthru
      _
    %v29 = vld [vmem:[#allocation3] sm:$0xff]
    %v30 = vld [vmem:[#allocation3 + $0x8] sm:$0xff]
    %v31 = vld [vmem:[%s1] sm:$0x1]
    %v33 = vlaneseq
    %v34 = vshrl.u32 %v33, 7
    %v35 = vsub.s32 0, %v34
    %v36 = vrot.slane %v31, %v35
    %v38 = vmul.f32 %v29, %v36
    %v39 = vmul.f32 %v30, %v36
    %vm40 = vcmask 261120
    %v41 = vsel %vm40, %v38, 0.0
    %42 = vadd.xlane.f32.xlu0 %v41
    %v43 = vpop.xlane.xlu0 %42
    %v44 = vsel %vm40, %v39, 0.0
    %45 = vadd.xlane.f32.xlu0 %v44
    %v46 = vpop.xlane.xlu0 %45
    %s47 = sld [smem:[#allocation2]]
    %v48 = vstv %s47
    %v49 = vadd.f32 %v43, %v48
    %v50 = vadd.f32 %v46, %v48
    %vm51 = vcmask 7168
    %52 = vst.msk [vmem:[%s3] sm:$0xff] %vm51, %v49
    %53 = vst.msk [vmem:[%s3 + $0x8] sm:$0xff] %vm51, %v50
    // Predicated region
    $region18: #{tpu_custom_call.1} parent=1 // pred_check
      _
    $region19: #{tpu_custom_call.1} parent=1 // pred_check_branch
      %55 = sbr.rel (0) target = $region21
    $region20: #{tpu_custom_call.1} parent=1 // pred_region
      _
    $region21: #{tpu_custom_call.1} parent=1 // pred_fallthru
      _
    // Predicated region
    $region22: #{tpu_custom_call.1} parent=1 // pred_check
      _
    $region23: #{tpu_custom_call.1} parent=1 // pred_check_branch
      %57 = sbr.rel (0) target = $region25
    $region24: #{tpu_custom_call.1} parent=1 // pred_region
      _
    $region25: #{tpu_custom_call.1} parent=1 // pred_fallthru
      _
    %58 = vsyncpa [#allocation4], 1

</llo_original>
